<compile_context>
chip_gen: v6e
topology: v6e:2x2x1
jax: 0.10.0
libtpu: 0.0.40
codegen_flags: <defaults>
</compile_context>

<pallas_src>
import jax
import jax.numpy as jnp
from jax.experimental import pallas as pl
from jax.experimental.pallas import tpu as pltpu

# Fixed Sobel filters from the module __init__ ((1,1,3,3) conv weights).
# The kernel below implements exactly these (cross-correlation, zero padding=1), separably.
_KERNEL_X = ((-1.0, 0.0, 1.0),
             (-2.0, 0.0, 2.0),
             (-1.0, 0.0, 1.0))
_KERNEL_Y = (( 1.0,  2.0,  1.0),
             ( 0.0,  0.0,  0.0),
             (-1.0, -2.0, -1.0))


def sobelxy_kernel(x_ref, o_ref):
    """One grid step processes `tb` whole (h, w) images.

    x_ref : (tb, h, w) input block (VMEM)
    o_ref : (tb, h, w) output block (VMEM)
    """
    x = x_ref[...]
    if x.dtype != jnp.float32:
        x = x.astype(jnp.float32)  # f32 accumulation, parity with F.conv2d
    tb, h, w = x.shape

    # ---- vertical halo (padding=1 along H) via zero-filled shifts in vregs ----
    zrow = jnp.zeros((tb, 1, w), jnp.float32)
    up = jnp.concatenate([zrow, x[:, : h - 1, :]], axis=1)   # x[y-1], zero at y == 0
    dn = jnp.concatenate([x[:, 1:, :], zrow], axis=1)        # x[y+1], zero at y == h-1

    # ---- separable Sobel, vertical stage (adds/subs only; *2 done as an add) ----
    s = up + (x + x) + dn        # (1, 2, 1) smooth
    d = up - dn                  # (1, 0, -1) diff

    # ---- horizontal halo (padding=1 along W) via zero-filled lane shifts ----
    zcol = jnp.zeros((tb, h, 1), jnp.float32)
    s_l = jnp.concatenate([zcol, s[:, :, : w - 1]], axis=2)  # s[x-1]
    s_r = jnp.concatenate([s[:, :, 1:], zcol], axis=2)       # s[x+1]
    d_l = jnp.concatenate([zcol, d[:, :, : w - 1]], axis=2)  # d[x-1]
    d_r = jnp.concatenate([d[:, :, 1:], zcol], axis=2)       # d[x+1]

    # ---- horizontal stage ----
    gx = s_r - s_l                       # conv2d(x, Kx, padding=1)
    gy = d_l + (d + d) + d_r             # conv2d(x, Ky, padding=1)

    o_ref[...] = (jnp.abs(gx) + jnp.abs(gy)).astype(o_ref.dtype)


def _pick_batch_tile(b, h, w, dtype):
    """Images folded per grid step: large enough to amortize the ~0.35us/step overhead,
    small enough that double-buffered in/out blocks plus live f32 temporaries stay far under
    the scoped-VMEM budget, while keeping >= 2 grid steps (pipelining / megacore) when b >= 2."""
    in_bytes = h * w * jnp.dtype(dtype).itemsize
    per_img = 2 * 2 * in_bytes + 6 * h * w * 4     # 2x-buffered in/out + ~6 live f32 temps
    vmem_budget = 8 << 20                          # stay well under the 32 MiB scoped limit
    cap = max(1, min(b, vmem_budget // max(per_img, 1)))
    if b >= 2:
        cap = min(cap, max(1, b // 2))             # keep at least 2 grid steps
    tb = 1
    for cand in range(1, cap + 1):                 # largest divisor of b not above cap
        if b % cand == 0:
            tb = cand
    return tb


def sobelxy(x):
    """x: (N, C, H, W). The module's conv weights are (1,1,3,3), i.e. C == 1 in PyTorch;
    channels (if any) are folded into the batch and processed independently."""
    n, c, h, w = x.shape
    b = n * c
    xf = x.reshape(b, h, w)

    tb = _pick_batch_tile(b, h, w, x.dtype)
    nb = b // tb

    out = pl.pallas_call(
        sobelxy_kernel,
        out_shape=jax.ShapeDtypeStruct((b, h, w), x.dtype),
        grid=(nb,),
        in_specs=[pl.BlockSpec((tb, h, w), lambda i: (i, 0, 0))],
        out_specs=pl.BlockSpec((tb, h, w), lambda i: (i, 0, 0)),
        compiler_params=pltpu.CompilerParams(
            dimension_semantics=("parallel",),      # batch blocks shard across TensorCores
            vmem_limit_bytes=32 * 1024 * 1024,
        ),
    )(xf)
    return out.reshape(n, c, h, w)


def _reference(x):
    """Pure-JAX reference with the same semantics as the PyTorch forward (per-channel)."""
    kx = jnp.array(_KERNEL_X, jnp.float32)[None, None]  # (1,1,3,3) OIHW
    ky = jnp.array(_KERNEL_Y, jnp.float32)[None, None]
    dn = ("NCHW", "OIHW", "NCHW")
    n, c, h, w = x.shape
    xf = x.reshape(n * c, 1, h, w).astype(jnp.float32)
    sx = jax.lax.conv_general_dilated(xf, kx, (1, 1), ((1, 1), (1, 1)),
                                      dimension_numbers=dn,
                                      precision=jax.lax.Precision.HIGHEST)
    sy = jax.lax.conv_general_dilated(xf, ky, (1, 1), ((1, 1), (1, 1)),
                                      dimension_numbers=dn,
                                      precision=jax.lax.Precision.HIGHEST)
    return (jnp.abs(sx) + jnp.abs(sy)).astype(x.dtype).reshape(n, c, h, w)


if __name__ == "__main__":
    k1, k2 = jax.random.split(jax.random.PRNGKey(0))

    # Primary case (matches the module's (1,1,3,3) conv weights: C == 1).
    x1 = jax.random.normal(k1, (2, 1, 16, 16), dtype=jnp.float32)
    out1 = jax.block_until_ready(sobelxy(x1))
    ref1 = _reference(x1)
    assert out1.shape == ref1.shape == (2, 1, 16, 16)
    assert jnp.allclose(out1, ref1, atol=1e-5, rtol=1e-5)

    # Batched-tile path: several small images folded into each grid step.
    x2 = jax.random.normal(k2, (16, 1, 8, 8), dtype=jnp.float32)
    out2 = jax.block_until_ready(sobelxy(x2))
    ref2 = _reference(x2)
    assert out2.shape == ref2.shape == (16, 1, 8, 8)
    assert jnp.allclose(out2, ref2, atol=1e-5, rtol=1e-5)

    print("KERNEL_OK")
</pallas_src>

<mosaic_0001>
module attributes {stable_mosaic.version = 11 : i64} {
  func.func @sobelxy_kernel(%arg0: i32, %arg1: memref<1x16x16xf32, #tpu.memory_space<vmem>>, %arg2: memref<1x16x16xf32, #tpu.memory_space<vmem>>) attributes {dimension_semantics = [#tpu.dimension_semantics<parallel>], iteration_bounds = array<i64: 2>, scalar_prefetch = 0 : i64, scratch_operands = 0 : i64, tpu.core_type = #tpu.core_type<tc>, window_params = [{transform_indices = @transform_0, window_bounds = array<i64: 1, 16, 16>}, {transform_indices = @transform_1, window_bounds = array<i64: 1, 16, 16>}]} {
    %c0 = arith.constant 0 : index
    %c0_0 = arith.constant 0 : index
    %c0_1 = arith.constant 0 : index
    %0 = vector.load %arg1[%c0, %c0_0, %c0_1] : memref<1x16x16xf32, #tpu.memory_space<vmem>>, vector<1x16x16xf32>
    %cst = arith.constant 0.000000e+00 : f32
    %1 = vector.broadcast %cst : f32 to vector<1x1x16xf32>
    %2 = vector.extract_strided_slice %0 {offsets = [0, 0, 0], sizes = [1, 15, 16], strides = [1, 1, 1]} : vector<1x16x16xf32> to vector<1x15x16xf32>
    %3 = tpu.concatenate %1, %2 in 1 : vector<1x1x16xf32>, vector<1x15x16xf32> -> vector<1x16x16xf32>
    %4 = vector.extract_strided_slice %0 {offsets = [0, 1, 0], sizes = [1, 15, 16], strides = [1, 1, 1]} : vector<1x16x16xf32> to vector<1x15x16xf32>
    %5 = tpu.concatenate %4, %1 in 1 : vector<1x15x16xf32>, vector<1x1x16xf32> -> vector<1x16x16xf32>
    %6 = arith.addf %0, %0 : vector<1x16x16xf32>
    %7 = arith.addf %3, %6 : vector<1x16x16xf32>
    %8 = arith.addf %7, %5 : vector<1x16x16xf32>
    %9 = arith.subf %3, %5 : vector<1x16x16xf32>
    %cst_2 = arith.constant 0.000000e+00 : f32
    %10 = vector.broadcast %cst_2 : f32 to vector<1x16x1xf32>
    %11 = vector.extract_strided_slice %8 {offsets = [0, 0, 0], sizes = [1, 16, 15], strides = [1, 1, 1]} : vector<1x16x16xf32> to vector<1x16x15xf32>
    %12 = tpu.concatenate %10, %11 in 2 : vector<1x16x1xf32>, vector<1x16x15xf32> -> vector<1x16x16xf32>
    %13 = vector.extract_strided_slice %8 {offsets = [0, 0, 1], sizes = [1, 16, 15], strides = [1, 1, 1]} : vector<1x16x16xf32> to vector<1x16x15xf32>
    %14 = tpu.concatenate %13, %10 in 2 : vector<1x16x15xf32>, vector<1x16x1xf32> -> vector<1x16x16xf32>
    %15 = vector.extract_strided_slice %9 {offsets = [0, 0, 0], sizes = [1, 16, 15], strides = [1, 1, 1]} : vector<1x16x16xf32> to vector<1x16x15xf32>
    %16 = tpu.concatenate %10, %15 in 2 : vector<1x16x1xf32>, vector<1x16x15xf32> -> vector<1x16x16xf32>
    %17 = vector.extract_strided_slice %9 {offsets = [0, 0, 1], sizes = [1, 16, 15], strides = [1, 1, 1]} : vector<1x16x16xf32> to vector<1x16x15xf32>
    %18 = tpu.concatenate %17, %10 in 2 : vector<1x16x15xf32>, vector<1x16x1xf32> -> vector<1x16x16xf32>
    %19 = arith.subf %14, %12 : vector<1x16x16xf32>
    %20 = arith.addf %9, %9 : vector<1x16x16xf32>
    %21 = arith.addf %16, %20 : vector<1x16x16xf32>
    %22 = arith.addf %21, %18 : vector<1x16x16xf32>
    %23 = math.absf %19 : vector<1x16x16xf32>
    %24 = math.absf %22 : vector<1x16x16xf32>
    %25 = arith.addf %23, %24 : vector<1x16x16xf32>
    %c0_3 = arith.constant 0 : index
    %c0_4 = arith.constant 0 : index
    %c0_5 = arith.constant 0 : index
    %26 = vector.load %arg2[%c0_3, %c0_4, %c0_5] : memref<1x16x16xf32, #tpu.memory_space<vmem>>, vector<1x16x16xf32>
    tpu.vector_store %arg2[%c0_3, %c0_4, %c0_5], %25 {strides = array<i32>} : memref<1x16x16xf32, #tpu.memory_space<vmem>>, vector<1x16x16xf32>,
    return
  }
  func.func @transform_0(%arg0: i32) -> (i32, i32, i32) {
    %c0_i32 = arith.constant 0 : i32
    %c0_i32_0 = arith.constant 0 : i32
    %c0_i32_1 = arith.constant 0 : i32
    return %arg0, %c0_i32, %c0_i32_0 : i32, i32, i32
  }
  func.func @transform_1(%arg0: i32) -> (i32, i32, i32) {
    %c0_i32 = arith.constant 0 : i32
    %c0_i32_0 = arith.constant 0 : i32
    %c0_i32_1 = arith.constant 0 : i32
    return %arg0, %c0_i32, %c0_i32_0 : i32, i32, i32
  }
}

</mosaic_0001>

<llo_original>
// kernel: tpu_custom_call.1
$region0: #{tpu_custom_call.1}
  #allocation0 [shape = 'u32[]', space=smem, size = 0x4, offset = 0x4, fixed_abs, tag = 'smem constant byte address 0x4 - core index']
  #allocation1 [shape = 'u32[144,128]{1,0:T(1,128)}', space=vmem, size = 0x12000, scoped, tag = 'internal scratch']
  %s0 = inlined_call_operand.hbm [shape: f32[2,16,16], index: 0, kind: input, shape index: {}]
  %s1 = inlined_call_operand.hbm [shape: f32[2,16,16], index: 1, kind: output, shape index: {}]
  %s2 = sld [smem:[#allocation0]]
  $region41: #{tpu_custom_call.1} parent=0
    _
  %s4 = ssub.s32 1, %s2
  %s5 = scalar_select 0, %s4, %s2
  $region1: #{tpu_custom_call.1} parent=0
    #allocation2 [shape = 'u8[16384]{0}', space=vmem, size = 0x4000, scoped, tag = 'input window, operand 0']
    #allocation3 [shape = 's32[2]{0}', space=sflag, size = 0x8, scoped, tag = 'scoped memory for tpu_custom_call.1']
    #allocation4 [shape = 's32[2]{0}', space=sflag, size = 0x8, scoped, tag = 'scoped memory for tpu_custom_call.1']
    #allocation5 [shape = 'u8[16384]{0}', space=vmem, size = 0x4000, scoped, tag = 'output window, operand 0']
    %6 = vsyncpa [#allocation3], 0
    %s7 = scalar_lea.sflag [#allocation3], 1
    %8 = vsyncpa %s7, 0
    %9 = vsyncpa [#allocation4], 0
    %s10 = scalar_lea.sflag [#allocation4], 1
    %11 = vsyncpa %s10, 0
    loop: start=0, step=1, limit=4
    $region2: #{tpu_custom_call.1} parent=1 // loop_pre_header
      _
    $region3: #{tpu_custom_call.1} parent=1 // loop_header
      %s13 = sphi 0, %s17
      %p14 = scmp.ge.s32.totalorder %s13, 4
      %s23 = sphi 0, %s25
      %s26 = sphi 0, %s23
      %s27 = sphi 0, %s26
      %s43 = sphi 0, %s27
      %s49 = sphi 0, %s51
      %s52 = sphi 0, %s49
      %s53 = sphi 0, %s52
      %s69 = sphi 0, %s53
    $region4: #{tpu_custom_call.1} parent=1 // loop_header_branch
      %16 = sbr.rel (%p14) target = $region8
    $region5: #{tpu_custom_call.1} parent=1 // loop_body
      %s18 = ssub.s32 %s13, 1
      %s19 = ssub.s32 %s13, 2
      %s20 = sadd.s32 %s13, 1
      %s21 = ssub.s32 %s13, %s20
      %p22 = scmp.eq.s32.totalorder %s21, 0
      %s24 = sadd.s32 %s23, 1
      %s25 = scalar_select %p22, %s23, %s24
      %p28 = pneg %p22
      %p29 = scmp.eq.s32.totalorder %s13, 1
      %p30 = por %p28, %p29
      %p31 = scmp.ne.s32.totalorder %s23, %s26
      %p32 = scmp.eq.s32.totalorder %s13, 0
      %p33 = por %p31, %p32
      %p34 = scmp.ne.s32.totalorder %s23, %s26
      %p35 = scmp.eq.s32.totalorder %s18, 1
      %p36 = por %p34, %p35
      %p37 = scmp.ne.s32.totalorder %s26, %s27
      %p38 = scmp.eq.s32.totalorder %s18, 0
      %p39 = por %p37, %p38
      %p40 = scmp.ne.s32.totalorder %s26, %s27
      %p41 = scmp.eq.s32.totalorder %s19, 1
      %p42 = por %p40, %p41
      %p44 = scmp.ne.s32.totalorder %s27, %s43
      %p45 = scmp.eq.s32.totalorder %s19, 0
      %p46 = por %p44, %p45
      %s47 = ssub.s32 %s13, %s20
      %p48 = scmp.eq.s32.totalorder %s47, 0
      %s50 = sadd.s32 %s49, 1
      %s51 = scalar_select %p48, %s49, %s50
      %p54 = pneg %p48
      %p55 = scmp.eq.s32.totalorder %s13, 1
      %p56 = por %p54, %p55
      %p57 = scmp.ne.s32.totalorder %s49, %s52
      %p58 = scmp.eq.s32.totalorder %s13, 0
      %p59 = por %p57, %p58
      %p60 = scmp.ne.s32.totalorder %s49, %s52
      %p61 = scmp.eq.s32.totalorder %s18, 1
      %p62 = por %p60, %p61
      %p63 = scmp.ne.s32.totalorder %s52, %s53
      %p64 = scmp.eq.s32.totalorder %s18, 0
      %p65 = por %p63, %p64
      %p66 = scmp.ne.s32.totalorder %s52, %s53
      %p67 = scmp.eq.s32.totalorder %s19, 1
      %p68 = por %p66, %p67
      %p70 = scmp.ne.s32.totalorder %s53, %s69
      %p71 = scmp.eq.s32.totalorder %s19, 0
      %p72 = por %p70, %p71
      %p73 = scmp.le.s32.totalorder 1, %s13
      %p74 = scmp.lt.s32.totalorder %s13, 3
      %p75 = pnand %p73, %p74
      %p76 = pneg %p75
      // Predicated region
      $region9: #{tpu_custom_call.1} parent=5 // pred_check
        _
      $region10: #{tpu_custom_call.1} parent=5 // pred_check_branch
        %78 = sbr.rel (%p75) target = $region12
      $region11: #{tpu_custom_call.1} parent=5 // pred_region
        %s79 = ssub.s32 %s13, 1
      $region12: #{tpu_custom_call.1} parent=5 // pred_fallthru
        _
      %p80 = scmp.lt.s32.totalorder %s13, 2
      // Predicated region
      $region13: #{tpu_custom_call.1} parent=5 // pred_check
        %p81 = pneg %p80
      $region14: #{tpu_custom_call.1} parent=5 // pred_check_branch
        %83 = sbr.rel (%p81) target = $region16
      $region15: #{tpu_custom_call.1} parent=5 // pred_region
        // Predicated region
        $region17: #{tpu_custom_call.1} parent=15 // pred_check
          %p84 = pneg %p33
        $region18: #{tpu_custom_call.1} parent=15 // pred_check_branch
          %86 = sbr.rel (%p84) target = $region20
        $region19: #{tpu_custom_call.1} parent=15 // pred_region
          %s87 = sand.u32 %s23, 1
          %s88 = scalar_lea.sflag [#allocation3], %s87
          %s89 = sand.u32 %s23, 1
          %s90 = smul.addr %s89, 16
          %s91 = scalar_lea.vmem [#allocation2], %s90
          %s93 = ssub.s32 256, 256
          %94 = vsyncadd %s88, %s93
          %s95 = smul.addr %s13, 2
          %s96 = smul.addr %s95, 128
          %s97 = scalar_lea.hbm %s0, %s96
          %s98 = sshll.u32 %s91, 4
          %s99 = int_to_ptr.vmem [resolvable:$true] %s98
          %104 = dma.hbm_to_vmem [thread:$0]  %s97, 256, %s99, %s88, 128, 128, 8
        $region20: #{tpu_custom_call.1} parent=15 // pred_fallthru
          _
      $region16: #{tpu_custom_call.1} parent=5 // pred_fallthru
        _
      %p105 = scmp.le.s32.totalorder 1, %s13
      %p106 = scmp.lt.s32.totalorder %s13, 3
      %p107 = pnand %p105, %p106
      %p108 = pneg %p107
      // Predicated region
      $region21: #{tpu_custom_call.1} parent=5 // pred_check
        _
      $region22: #{tpu_custom_call.1} parent=5 // pred_check_branch
        %110 = sbr.rel (%p107) target = $region24
      $region23: #{tpu_custom_call.1} parent=5 // pred_region
        %s111 = ssub.s32 %s13, 1
        %s112 = sand.u32 %s26, 1
        %s113 = scalar_lea.sflag [#allocation3], %s112
        %s114 = sand.u32 %s26, 1
        %s115 = smul.addr %s114, 16
        %s116 = scalar_lea.vmem [#allocation2], %s115
        // Predicated region
        $region25: #{tpu_custom_call.1} parent=23 // pred_check
          %p117 = pneg %p39
        $region26: #{tpu_custom_call.1} parent=23 // pred_check_branch
          %119 = sbr.rel (%p117) target = $region28
        $region27: #{tpu_custom_call.1} parent=23 // pred_region
          %120 = dma.done %s113, 256
        $region28: #{tpu_custom_call.1} parent=23 // pred_fallthru
          _
        %s121 = sand.u32 %s26, 1
        %s122 = scalar_lea.sflag [#allocation3], %s121
        %s123 = sand.u32 %s26, 1
        %s124 = smul.addr %s123, 16
        %s125 = scalar_lea.vmem [#allocation2], %s124
        %p126 = pneg %p39
        %p127 = pneg %p36
        %p128 = pneg %p65
        %p129 = pneg %p62
        %s130 = sand.u32 %s52, 1
        %s131 = scalar_lea.sflag [#allocation4], %s130
        %s132 = sand.u32 %s52, 1
        %s133 = smul.addr %s132, 16
        %s134 = scalar_lea.vmem [#allocation5], %s133
        %v135 = vld [vmem:[%s116] sm:$0xff]
        %v136 = vld [vmem:[%s116 + $0x8] sm:$0xff]
        %vm139 = vcmask 1040384
        %v140 = vrot.slane %v135, 7
        %v141 = vrot.slane %v136, 7
        %v142 = vsel %vm139, %v140, %v141
        %v145 = vsel %vm139, 0.0, %v140
        %vm146 = vcmask 1046528
        %v147 = vrot.slane %v135, 1
        %v148 = vrot.slane %v136, 1
        %v149 = vsel %vm146, %v147, %v148
        %v152 = vsel %vm146, %v148, 0.0
        %v153 = vadd.f32 %v135, %v135
        %v154 = vadd.f32 %v136, %v136
        %v155 = vadd.f32 %v145, %v153
        %v156 = vadd.f32 %v142, %v154
        %v157 = vadd.f32 %v155, %v149
        %v158 = vadd.f32 %v156, %v152
        %v159 = vsub.f32 %v145, %v149
        %v160 = vsub.f32 %v142, %v152
        %163 = vrot.lane.b32.xlu0 %v157, 1
        %v164 = vpop.permute.xlu0 %163
        %165 = vrot.lane.b32.xlu0 %v158, 1
        %v166 = vpop.permute.xlu0 %165
        %vm169 = vcmask 7168
        %v170 = vsel %vm169, 0.0, %v164
        %v171 = vsel %vm169, 0.0, %v166
        %172 = vrot.lane.b32.xlu0 %v157, 127
        %v173 = vpop.permute.xlu0 %172
        %174 = vrot.lane.b32.xlu0 %v158, 127
        %v175 = vpop.permute.xlu0 %174
        %vm178 = vcmask 121856
        %v179 = vsel %vm178, %v173, 0.0
        %v180 = vsel %vm178, %v175, 0.0
        %183 = vrot.lane.b32.xlu0 %v159, 1
        %v184 = vpop.permute.xlu0 %183
        %185 = vrot.lane.b32.xlu0 %v160, 1
        %v186 = vpop.permute.xlu0 %185
        %v189 = vsel %vm169, 0.0, %v184
        %v190 = vsel %vm169, 0.0, %v186
        %191 = vrot.lane.b32.xlu0 %v159, 127
        %v192 = vpop.permute.xlu0 %191
        %193 = vrot.lane.b32.xlu0 %v160, 127
        %v194 = vpop.permute.xlu0 %193
        %v197 = vsel %vm178, %v192, 0.0
        %v198 = vsel %vm178, %v194, 0.0
        %v199 = vsub.f32 %v179, %v170
        %v200 = vsub.f32 %v180, %v171
        %v201 = vadd.f32 %v159, %v159
        %v202 = vadd.f32 %v160, %v160
        %v203 = vadd.f32 %v189, %v201
        %v204 = vadd.f32 %v190, %v202
        %v205 = vadd.f32 %v203, %v197
        %v206 = vadd.f32 %v204, %v198
        %v207 = vand.u32 2147483647, %v199
        %v208 = vand.u32 2147483647, %v200
        %v209 = vand.u32 2147483647, %v205
        %v210 = vand.u32 2147483647, %v206
        %v211 = vadd.f32 %v207, %v209
        %v212 = vadd.f32 %v208, %v210
        %vm213 = vcmask 130048
        %214 = vst.msk [vmem:[%s134] sm:$0xff] %vm213, %v211
        %215 = vst.msk [vmem:[%s134 + $0x8] sm:$0xff] %vm213, %v212
        %s216 = sand.u32 %s52, 1
        %s217 = scalar_lea.sflag [#allocation4], %s216
        %s218 = sand.u32 %s52, 1
        %s219 = smul.addr %s218, 16
        %s220 = scalar_lea.vmem [#allocation5], %s219
        // Predicated region
        $region29: #{tpu_custom_call.1} parent=23 // pred_check
          %p221 = pneg %p62
        $region30: #{tpu_custom_call.1} parent=23 // pred_check_branch
          %223 = sbr.rel (%p221) target = $region32
        $region31: #{tpu_custom_call.1} parent=23 // pred_region
          %s225 = ssub.s32 256, 256
          %226 = vsyncadd %s217, %s225
          %s227 = smul.addr %s18, 2
          %s228 = smul.addr %s227, 128
          %s229 = scalar_lea.hbm %s1, %s228
          %s230 = sshll.u32 %s220, 4
          %s231 = int_to_ptr.vmem [resolvable:$true] %s230
          %236 = dma.vmem_to_hbm [thread:$0]  %s231, 256, %s229, %s217, 128, 128, 8
        $region32: #{tpu_custom_call.1} parent=23 // pred_fallthru
          _
      $region24: #{tpu_custom_call.1} parent=5 // pred_fallthru
        _
      %p237 = scmp.le.s32.totalorder 2, %s13
      // Predicated region
      $region33: #{tpu_custom_call.1} parent=5 // pred_check
        %p238 = pneg %p237
      $region34: #{tpu_custom_call.1} parent=5 // pred_check_branch
        %240 = sbr.rel (%p238) target = $region36
      $region35: #{tpu_custom_call.1} parent=5 // pred_region
        %s241 = ssub.s32 %s13, 2
        // Predicated region
        $region37: #{tpu_custom_call.1} parent=35 // pred_check
          %p242 = pneg %p68
        $region38: #{tpu_custom_call.1} parent=35 // pred_check_branch
          %244 = sbr.rel (%p242) target = $region40
        $region39: #{tpu_custom_call.1} parent=35 // pred_region
          %s245 = sand.u32 %s53, 1
          %s246 = scalar_lea.sflag [#allocation4], %s245
          %s247 = sand.u32 %s53, 1
          %s248 = smul.addr %s247, 16
          %s249 = scalar_lea.vmem [#allocation5], %s248
          %250 = dma.done %s246, 256
        $region40: #{tpu_custom_call.1} parent=35 // pred_fallthru
          _
      $region36: #{tpu_custom_call.1} parent=5 // pred_fallthru
        _
    $region6: #{tpu_custom_call.1} parent=1 // loop_footer
      %s17 = sadd.s32 1, %s13
    $region7: #{tpu_custom_call.1} parent=1 // loop_footer_branch
      %12 = sbr.rel target = $region3
    $region8: #{tpu_custom_call.1} parent=1 // loop_exit
      _
    %251 = vsyncpa [#allocation3], 1
    %s252 = scalar_lea.sflag [#allocation3], 1
    %253 = vsyncpa %s252, 1
    %254 = vsyncpa [#allocation4], 1
    %s255 = scalar_lea.sflag [#allocation4], 1
    %256 = vsyncpa %s255, 1

</llo_original>
